<compile_context>
chip_gen: v7x
topology: tpu7x:2x2x1
jax: 0.10.0
libtpu: 0.0.40
codegen_flags: <defaults>
</compile_context>

<pallas_src>
import jax
import jax.numpy as jnp
from jax import lax
from jax.experimental import pallas as pl
from jax.experimental.pallas import tpu as pltpu

NUM_HEADS = 1
IN_FEATURES = 3                     # Linear in_features
KEY_LEN = 4                         # Linear out_features / head dim
VALUE_LEN = 4
SEQ_LEN = 4                         # rows of inp (see TODO above)
SCALE_MUL = float(KEY_LEN) ** 0.5   # qk.div(key_len**-0.5) == qk * sqrt(key_len)
DROPOUT_P = 0.2
KEEP_SCALE = 1.0 / (1.0 - DROPOUT_P)
DROP_THRESHOLD_U32 = int(DROPOUT_P * (1 << 32))  # bits < threshold -> dropped

AUG = IN_FEATURES + 1               # x augmented with a ones column (bias folded in)
QKV = 3 * KEY_LEN                   # packed q|k|v projection width


def _attn_kernel(x_ref, w_ref, bits_ref, o_ref):
    # x_ref: (1, L, AUG) f32, w_ref: (AUG, QKV) f32,
    # bits_ref: (1, L, L) uint32, o_ref: (1, L, VALUE_LEN) f32
    x = x_ref[0]                         # (L, AUG)
    bits = bits_ref[0]                   # (L, L)

    # Fused QKV projection; bias rows already appended to w (x has ones column).
    qkv = jnp.dot(x, w_ref[...], preferred_element_type=jnp.float32)    # (L, 3*KEY_LEN)
    q = qkv[:, :KEY_LEN]
    k = qkv[:, KEY_LEN:2 * KEY_LEN]
    v = qkv[:, 2 * KEY_LEN:]

    # q @ k^T without materializing the transpose: contract feature dims.
    qk = lax.dot_general(q, k, dimension_numbers=(((1,), (1,)), ((), ())),
                         preferred_element_type=jnp.float32)            # (L, L)

    # Bug-for-bug parity with the module: divide by key_len**-0.5.
    scaled = qk * SCALE_MUL

    # Softmax over last dim.
    m = jnp.max(scaled, axis=-1, keepdims=True)
    e = jnp.exp(scaled - m)
    p = e / jnp.sum(e, axis=-1, keepdims=True)

    # Dropout(p=0.2), training semantics: integer threshold on raw uint32 bits,
    # 1/(1-p) rescale folded into the select.
    keep = bits >= jnp.uint32(DROP_THRESHOLD_U32)
    p_drop = jnp.where(keep, p * KEEP_SCALE, 0.0)

    o_ref[0] = jnp.dot(p_drop, v, preferred_element_type=jnp.float32)   # (L, VALUE_LEN)


def attention_batch(x_aug, w_aug, bits):
    """x_aug: (B, L, AUG), w_aug: (AUG, QKV), bits: (B, L, L) uint32 -> (B, L, VALUE_LEN)."""
    B = x_aug.shape[0]
    return pl.pallas_call(
        _attn_kernel,
        out_shape=jax.ShapeDtypeStruct((B, SEQ_LEN, VALUE_LEN), jnp.float32),
        grid=(B,),
        in_specs=[
            pl.BlockSpec((1, SEQ_LEN, AUG), lambda b: (b, 0, 0)),
            pl.BlockSpec((AUG, QKV), lambda b: (0, 0)),
            pl.BlockSpec((1, SEQ_LEN, SEQ_LEN), lambda b: (b, 0, 0)),
        ],
        out_specs=pl.BlockSpec((1, SEQ_LEN, VALUE_LEN), lambda b: (b, 0, 0)),
        compiler_params=pltpu.CompilerParams(dimension_semantics=("parallel",)),
    )(x_aug, w_aug, bits)


def model_forward(inp, w_aug, dropout_key):
    """inp: (B, SEQ_LEN, IN_FEATURES) f32 -> (B, NUM_HEADS, SEQ_LEN, VALUE_LEN) f32."""
    B = inp.shape[0]
    # Append a ones column so the packed weight's bias row is applied by the matmul.
    x_aug = jnp.concatenate(
        [inp.astype(jnp.float32), jnp.ones((B, SEQ_LEN, 1), jnp.float32)], axis=-1)
    # Dropout randomness drawn outside the kernel (interpret-mode safe), thresholded inside.
    bits = jax.random.bits(dropout_key, (B, SEQ_LEN, SEQ_LEN), dtype=jnp.uint32)
    out = attention_batch(x_aug, w_aug, bits)                # (B, L, VALUE_LEN)
    return out.reshape(B, NUM_HEADS, SEQ_LEN, VALUE_LEN)


def init_params(key):
    """Deterministic stand-ins for the three nn.Linear(3, 4) layers, packed.

    PyTorch Linear stores weight as (out, in); we pack [Wq^T | Wk^T | Wv^T] and
    append the bias row -> a single (AUG, 3*KEY_LEN) augmented matrix.
    """
    ks = jax.random.split(key, 6)

    def lin(kw, kb):
        w = jax.random.normal(kw, (KEY_LEN, IN_FEATURES), jnp.float32) * 0.3   # (out, in)
        b = jax.random.normal(kb, (KEY_LEN,), jnp.float32) * 0.1               # (out,)
        return w, b

    wq, bq = lin(ks[0], ks[1])
    wk, bk = lin(ks[2], ks[3])
    wv, bv = lin(ks[4], ks[5])

    w_qkv_t = jnp.concatenate([wq.T, wk.T, wv.T], axis=1)            # (IN_FEATURES, QKV)
    b_qkv = jnp.concatenate([bq, bk, bv], axis=0).reshape(1, QKV)    # (1, QKV)
    w_aug = jnp.concatenate([w_qkv_t, b_qkv], axis=0)                # (AUG, QKV)
    return w_aug


if __name__ == "__main__":
    key = jax.random.PRNGKey(0)
    k_inp, k_par, k_drop = jax.random.split(key, 3)

    B = 2                                                    # two independent instances
    inp = jax.random.normal(k_inp, (B, SEQ_LEN, IN_FEATURES), jnp.float32)
    w_aug = init_params(k_par)

    out = model_forward(inp, w_aug, k_drop)
    jax.block_until_ready(out)
    assert out.shape == (B, NUM_HEADS, SEQ_LEN, VALUE_LEN)
    print("KERNEL_OK")
</pallas_src>

<mosaic_0001>
module attributes {stable_mosaic.version = 11 : i64} {
  func.func @_attn_kernel(%arg0: i32, %arg1: memref<1x4x4xf32, #tpu.memory_space<vmem>>, %arg2: memref<4x12xf32, #tpu.memory_space<vmem>>, %arg3: memref<1x4x4xi32, #tpu.memory_space<vmem>>, %arg4: memref<1x4x4xf32, #tpu.memory_space<vmem>>) attributes {dimension_semantics = [#tpu.dimension_semantics<parallel>], iteration_bounds = array<i64: 2>, scalar_prefetch = 0 : i64, scratch_operands = 0 : i64, tpu.core_type = #tpu.core_type<tc>, window_params = [{transform_indices = @transform_0, window_bounds = array<i64: 1, 4, 4>}, {pipeline_mode = #tpu.pipeline_mode<synchronous>, transform_indices = @transform_1, window_bounds = array<i64: 4, 12>}, {transform_indices = @transform_2, window_bounds = array<i64: 1, 4, 4>}, {transform_indices = @transform_3, window_bounds = array<i64: 1, 4, 4>}]} {
    %c0 = arith.constant 0 : index
    %c0_0 = arith.constant 0 : index
    %c0_1 = arith.constant 0 : index
    %0 = vector.load %arg1[%c0, %c0_0, %c0_1] : memref<1x4x4xf32, #tpu.memory_space<vmem>>, vector<1x4x4xf32>
    %1 = vector.shape_cast %0 : vector<1x4x4xf32> to vector<4x4xf32>
    %c0_2 = arith.constant 0 : index
    %c0_3 = arith.constant 0 : index
    %c0_4 = arith.constant 0 : index
    %2 = vector.load %arg3[%c0_2, %c0_3, %c0_4] : memref<1x4x4xi32, #tpu.memory_space<vmem>>, vector<1x4x4xi32>
    %3 = vector.shape_cast %2 : vector<1x4x4xi32> to vector<4x4xi32>
    %c0_5 = arith.constant 0 : index
    %c0_6 = arith.constant 0 : index
    %4 = vector.load %arg2[%c0_5, %c0_6] : memref<4x12xf32, #tpu.memory_space<vmem>>, vector<4x12xf32>
    %cst = arith.constant dense<0.000000e+00> : vector<4x12xf32>
    %5 = tpu.matmul %1, %4, %cst {dimension_numbers = #tpu.dot_dimension_numbers<[1], [0], [0], [1], [0, 0, 1, 1], [], []>} : vector<4x4xf32>, vector<4x12xf32>, vector<4x12xf32> -> vector<4x12xf32>
    %6 = vector.extract_strided_slice %5 {offsets = [0, 0], sizes = [4, 4], strides = [1, 1]} : vector<4x12xf32> to vector<4x4xf32>
    %7 = vector.extract_strided_slice %5 {offsets = [0, 4], sizes = [4, 4], strides = [1, 1]} : vector<4x12xf32> to vector<4x4xf32>
    %8 = vector.extract_strided_slice %5 {offsets = [0, 8], sizes = [4, 4], strides = [1, 1]} : vector<4x12xf32> to vector<4x4xf32>
    %cst_7 = arith.constant dense<0.000000e+00> : vector<4x4xf32>
    %9 = tpu.matmul %6, %7, %cst_7 {dimension_numbers = #tpu.dot_dimension_numbers<[1], [1], [0], [0], [0, 0, 1, 0], [], []>} : vector<4x4xf32>, vector<4x4xf32>, vector<4x4xf32> -> vector<4x4xf32>
    %cst_8 = arith.constant 2.000000e+00 : f32
    %10 = vector.broadcast %cst_8 : f32 to vector<4x4xf32>
    %11 = arith.mulf %9, %10 : vector<4x4xf32>
    %cst_9 = arith.constant dense<0xFF800000> : vector<4xf32>
    %12 = vector.multi_reduction <maximumf>, %11, %cst_9 [1] : vector<4x4xf32> to vector<4xf32>
    %13 = vector.shape_cast %12 : vector<4xf32> to vector<4x1xf32>
    %14 = vector.broadcast %13 : vector<4x1xf32> to vector<4x4xf32>
    %15 = arith.subf %11, %14 : vector<4x4xf32>
    %16 = math.exp %15 : vector<4x4xf32>
    %cst_10 = arith.constant dense<0.000000e+00> : vector<4xf32>
    %17 = vector.multi_reduction <add>, %16, %cst_10 [1] : vector<4x4xf32> to vector<4xf32>
    %18 = vector.shape_cast %17 : vector<4xf32> to vector<4x1xf32>
    %19 = vector.broadcast %18 : vector<4x1xf32> to vector<4x4xf32>
    %20 = arith.divf %16, %19 : vector<4x4xf32>
    %c858993459_i32 = arith.constant 858993459 : i32
    %21 = vector.broadcast %c858993459_i32 : i32 to vector<4x4xi32>
    %22 = arith.cmpi uge, %3, %21 : vector<4x4xi32>
    %cst_11 = arith.constant 1.250000e+00 : f32
    %23 = vector.broadcast %cst_11 : f32 to vector<4x4xf32>
    %24 = arith.mulf %20, %23 : vector<4x4xf32>
    %cst_12 = arith.constant 0.000000e+00 : f32
    %25 = vector.broadcast %cst_12 : f32 to vector<4x4xf32>
    %26 = arith.select %22, %24, %25 : vector<4x4xi1>, vector<4x4xf32>
    %cst_13 = arith.constant dense<0.000000e+00> : vector<4x4xf32>
    %27 = tpu.matmul %26, %8, %cst_13 {dimension_numbers = #tpu.dot_dimension_numbers<[1], [0], [0], [1], [0, 0, 1, 1], [], []>} : vector<4x4xf32>, vector<4x4xf32>, vector<4x4xf32> -> vector<4x4xf32>
    %c0_14 = arith.constant 0 : index
    %c0_15 = arith.constant 0 : index
    %c0_16 = arith.constant 0 : index
    %28 = vector.load %arg4[%c0_14, %c0_15, %c0_16] : memref<1x4x4xf32, #tpu.memory_space<vmem>>, vector<1x4x4xf32>
    %29 = vector.shape_cast %28 : vector<1x4x4xf32> to vector<4x4xf32>
    %30 = vector.shape_cast %27 : vector<4x4xf32> to vector<1x4x4xf32>
    tpu.vector_store %arg4[%c0_14, %c0_15, %c0_16], %30 {strides = array<i32>} : memref<1x4x4xf32, #tpu.memory_space<vmem>>, vector<1x4x4xf32>,
    return
  }
  func.func @transform_0(%arg0: i32) -> (i32, i32, i32) {
    %c0_i32 = arith.constant 0 : i32
    %c0_i32_0 = arith.constant 0 : i32
    %c0_i32_1 = arith.constant 0 : i32
    return %arg0, %c0_i32, %c0_i32_0 : i32, i32, i32
  }
  func.func @transform_1(%arg0: i32) -> (i32, i32) {
    %c0_i32 = arith.constant 0 : i32
    %c0_i32_0 = arith.constant 0 : i32
    %c0_i32_1 = arith.constant 0 : i32
    return %c0_i32, %c0_i32_0 : i32, i32
  }
  func.func @transform_2(%arg0: i32) -> (i32, i32, i32) {
    %c0_i32 = arith.constant 0 : i32
    %c0_i32_0 = arith.constant 0 : i32
    %c0_i32_1 = arith.constant 0 : i32
    return %arg0, %c0_i32, %c0_i32_0 : i32, i32, i32
  }
  func.func @transform_3(%arg0: i32) -> (i32, i32, i32) {
    %c0_i32 = arith.constant 0 : i32
    %c0_i32_0 = arith.constant 0 : i32
    %c0_i32_1 = arith.constant 0 : i32
    return %arg0, %c0_i32, %c0_i32_0 : i32, i32, i32
  }
}

</mosaic_0001>

<llo_original>
// kernel: tpu_custom_call.1
$region0: #{tpu_custom_call.1}
  #allocation0 [shape = 'u32[]', space=smem, size = 0x4, offset = 0x4, fixed_abs, tag = 'smem constant byte address 0x4 - core index']
  #allocation1 [shape = 'u32[144,128]{1,0:T(1,128)}', space=vmem, size = 0x12000, scoped, tag = 'internal scratch']
  %s0 = inlined_call_operand.hbm [shape: f32[2,4,4], index: 0, kind: input, shape index: {}]
  %s1 = inlined_call_operand.hbm [shape: f32[4,12], index: 1, kind: input, shape index: {}]
  %s2 = inlined_call_operand.hbm [shape: u32[2,4,4], index: 2, kind: input, shape index: {}]
  %s3 = inlined_call_operand.hbm [shape: f32[2,4,4], index: 3, kind: output, shape index: {}]
  %s4 = sld [smem:[#allocation0]]
  $region57: #{tpu_custom_call.1} parent=0
    _
  %s6 = ssub.s32 1, %s4
  %s7 = scalar_select 0, %s6, %s4
  $region1: #{tpu_custom_call.1} parent=0
    #allocation2 [shape = 'u8[4096]{0}', space=vmem, size = 0x1000, scoped, tag = 'input window, operand 0']
    #allocation3 [shape = 's32[2]{0}', space=sflag, size = 0x8, scoped, tag = 'scoped memory for tpu_custom_call.1']
    #allocation4 [shape = 's32[2]{0}', space=sflag, size = 0x8, scoped, tag = 'scoped memory for tpu_custom_call.1']
    #allocation5 [shape = 'u8[2048]{0}', space=vmem, size = 0x800, scoped, tag = 'input window, operand 1, single buffered']
    #allocation6 [shape = 's32[1]{0}', space=sflag, size = 0x4, scoped, tag = 'scoped memory for tpu_custom_call.1']
    #allocation7 [shape = 'u8[4096]{0}', space=vmem, size = 0x1000, scoped, tag = 'input window, operand 2']
    #allocation8 [shape = 'u8[4096]{0}', space=vmem, size = 0x1000, scoped, tag = 'output window, operand 0']
    %8 = vsyncpa [#allocation3], 0
    %s9 = scalar_lea.sflag [#allocation3], 1
    %10 = vsyncpa %s9, 0
    %11 = vsyncpa [#allocation6], 0
    %12 = vsyncpa [#allocation4], 0
    %s13 = scalar_lea.sflag [#allocation4], 1
    %14 = vsyncpa %s13, 0
    loop: start=0, step=1, limit=4
    $region2: #{tpu_custom_call.1} parent=1 // loop_pre_header
      _
    $region3: #{tpu_custom_call.1} parent=1 // loop_header
      %s16 = sphi 0, %s20
      %p17 = scmp.ge.s32.totalorder %s16, 4
      %s26 = sphi 0, %s28
      %s29 = sphi 0, %s26
      %s30 = sphi 0, %s29
      %s46 = sphi 0, %s30
      %s50 = sphi 0, %s50
      %s52 = sphi 0, %s50
      %s53 = sphi 0, %s52
      %s67 = sphi 0, %s53
      %s73 = sphi 0, %s75
      %s76 = sphi 0, %s73
      %s77 = sphi 0, %s76
      %s93 = sphi 0, %s77
      %s99 = sphi 0, %s101
      %s102 = sphi 0, %s99
      %s103 = sphi 0, %s102
      %s119 = sphi 0, %s103
    $region4: #{tpu_custom_call.1} parent=1 // loop_header_branch
      %19 = sbr.rel (%p17) target = $region8
    $region5: #{tpu_custom_call.1} parent=1 // loop_body
      %s21 = ssub.s32 %s16, 1
      %s22 = ssub.s32 %s16, 2
      %s23 = sadd.s32 %s16, 1
      %s24 = ssub.s32 %s16, %s23
      %p25 = scmp.eq.s32.totalorder %s24, 0
      %s27 = sadd.s32 %s26, 1
      %s28 = scalar_select %p25, %s26, %s27
      %p31 = pneg %p25
      %p32 = scmp.eq.s32.totalorder %s16, 1
      %p33 = por %p31, %p32
      %p34 = scmp.ne.s32.totalorder %s26, %s29
      %p35 = scmp.eq.s32.totalorder %s16, 0
      %p36 = por %p34, %p35
      %p37 = scmp.ne.s32.totalorder %s26, %s29
      %p38 = scmp.eq.s32.totalorder %s21, 1
      %p39 = por %p37, %p38
      %p40 = scmp.ne.s32.totalorder %s29, %s30
      %p41 = scmp.eq.s32.totalorder %s21, 0
      %p42 = por %p40, %p41
      %p43 = scmp.ne.s32.totalorder %s29, %s30
      %p44 = scmp.eq.s32.totalorder %s22, 1
      %p45 = por %p43, %p44
      %p47 = scmp.ne.s32.totalorder %s30, %s46
      %p48 = scmp.eq.s32.totalorder %s22, 0
      %p49 = por %p47, %p48
      %s51 = sadd.s32 %s50, 1
      %p54 = scmp.eq.s32.totalorder %s16, 1
      %p55 = scmp.ne.s32.totalorder %s50, %s52
      %p56 = scmp.eq.s32.totalorder %s16, 0
      %p57 = por %p55, %p56
      %p58 = scmp.ne.s32.totalorder %s50, %s52
      %p59 = scmp.eq.s32.totalorder %s21, 1
      %p60 = por %p58, %p59
      %p61 = scmp.ne.s32.totalorder %s52, %s53
      %p62 = scmp.eq.s32.totalorder %s21, 0
      %p63 = por %p61, %p62
      %p64 = scmp.ne.s32.totalorder %s52, %s53
      %p65 = scmp.eq.s32.totalorder %s22, 1
      %p66 = por %p64, %p65
      %p68 = scmp.ne.s32.totalorder %s53, %s67
      %p69 = scmp.eq.s32.totalorder %s22, 0
      %p70 = por %p68, %p69
      %s71 = ssub.s32 %s16, %s23
      %p72 = scmp.eq.s32.totalorder %s71, 0
      %s74 = sadd.s32 %s73, 1
      %s75 = scalar_select %p72, %s73, %s74
      %p78 = pneg %p72
      %p79 = scmp.eq.s32.totalorder %s16, 1
      %p80 = por %p78, %p79
      %p81 = scmp.ne.s32.totalorder %s73, %s76
      %p82 = scmp.eq.s32.totalorder %s16, 0
      %p83 = por %p81, %p82
      %p84 = scmp.ne.s32.totalorder %s73, %s76
      %p85 = scmp.eq.s32.totalorder %s21, 1
      %p86 = por %p84, %p85
      %p87 = scmp.ne.s32.totalorder %s76, %s77
      %p88 = scmp.eq.s32.totalorder %s21, 0
      %p89 = por %p87, %p88
      %p90 = scmp.ne.s32.totalorder %s76, %s77
      %p91 = scmp.eq.s32.totalorder %s22, 1
      %p92 = por %p90, %p91
      %p94 = scmp.ne.s32.totalorder %s77, %s93
      %p95 = scmp.eq.s32.totalorder %s22, 0
      %p96 = por %p94, %p95
      %s97 = ssub.s32 %s16, %s23
      %p98 = scmp.eq.s32.totalorder %s97, 0
      %s100 = sadd.s32 %s99, 1
      %s101 = scalar_select %p98, %s99, %s100
      %p104 = pneg %p98
      %p105 = scmp.eq.s32.totalorder %s16, 1
      %p106 = por %p104, %p105
      %p107 = scmp.ne.s32.totalorder %s99, %s102
      %p108 = scmp.eq.s32.totalorder %s16, 0
      %p109 = por %p107, %p108
      %p110 = scmp.ne.s32.totalorder %s99, %s102
      %p111 = scmp.eq.s32.totalorder %s21, 1
      %p112 = por %p110, %p111
      %p113 = scmp.ne.s32.totalorder %s102, %s103
      %p114 = scmp.eq.s32.totalorder %s21, 0
      %p115 = por %p113, %p114
      %p116 = scmp.ne.s32.totalorder %s102, %s103
      %p117 = scmp.eq.s32.totalorder %s22, 1
      %p118 = por %p116, %p117
      %p120 = scmp.ne.s32.totalorder %s103, %s119
      %p121 = scmp.eq.s32.totalorder %s22, 0
      %p122 = por %p120, %p121
      %p123 = scmp.le.s32.totalorder 1, %s16
      %p124 = scmp.lt.s32.totalorder %s16, 3
      %p125 = pnand %p123, %p124
      %p126 = pneg %p125
      // Predicated region
      $region9: #{tpu_custom_call.1} parent=5 // pred_check
        _
      $region10: #{tpu_custom_call.1} parent=5 // pred_check_branch
        %128 = sbr.rel (%p125) target = $region12
      $region11: #{tpu_custom_call.1} parent=5 // pred_region
        %s129 = ssub.s32 %s16, 1
        // Predicated region
        $region13: #{tpu_custom_call.1} parent=11 // pred_check
          %p130 = pneg %p63
        $region14: #{tpu_custom_call.1} parent=11 // pred_check_branch
          %132 = sbr.rel (%p130) target = $region16
        $region15: #{tpu_custom_call.1} parent=11 // pred_region
          %s134 = ssub.s32 64, 64
          %135 = vsyncadd [#allocation6], %s134
          %s137 = sshll.u32 [#allocation5], 4
          %s138 = int_to_ptr.vmem [resolvable:$true] %s137
          %140 = dma.hbm_to_vmem [thread:$0]  %s1, 64, %s138, [#allocation6]
        $region16: #{tpu_custom_call.1} parent=11 // pred_fallthru
          _
      $region12: #{tpu_custom_call.1} parent=5 // pred_fallthru
        _
      %p141 = scmp.lt.s32.totalorder %s16, 2
      // Predicated region
      $region17: #{tpu_custom_call.1} parent=5 // pred_check
        %p142 = pneg %p141
      $region18: #{tpu_custom_call.1} parent=5 // pred_check_branch
        %144 = sbr.rel (%p142) target = $region20
      $region19: #{tpu_custom_call.1} parent=5 // pred_region
        // Predicated region
        $region21: #{tpu_custom_call.1} parent=19 // pred_check
          %p145 = pneg %p36
        $region22: #{tpu_custom_call.1} parent=19 // pred_check_branch
          %147 = sbr.rel (%p145) target = $region24
        $region23: #{tpu_custom_call.1} parent=19 // pred_region
          %s148 = sand.u32 %s16, 1
          %s149 = scalar_lea.sflag [#allocation3], %s148
          %s150 = sand.u32 %s26, 1
          %s151 = smul.addr %s150, 4
          %s152 = scalar_lea.vmem [#allocation2], %s151
          %s154 = ssub.s32 64, 64
          %155 = vsyncadd %s149, %s154
          %s156 = smul.addr %s16, 64
          %s157 = scalar_lea.hbm %s0, %s156
          %s159 = sshll.u32 %s152, 4
          %s160 = int_to_ptr.vmem [resolvable:$true] %s159
          %162 = dma.hbm_to_vmem [thread:$0]  %s157, 64, %s160, %s149
        $region24: #{tpu_custom_call.1} parent=19 // pred_fallthru
          _
        // Predicated region
        $region25: #{tpu_custom_call.1} parent=19 // pred_check
          %p163 = pneg %p83
        $region26: #{tpu_custom_call.1} parent=19 // pred_check_branch
          %165 = sbr.rel (%p163) target = $region28
        $region27: #{tpu_custom_call.1} parent=19 // pred_region
          %s166 = sand.u32 %s16, 1
          %s167 = scalar_lea.sflag [#allocation3], %s166
          %s168 = sand.u32 %s73, 1
          %s169 = smul.addr %s168, 4
          %s170 = scalar_lea.vmem [#allocation7], %s169
          %s172 = ssub.s32 64, 64
          %173 = vsyncadd %s167, %s172
          %s174 = smul.addr %s16, 64
          %s175 = scalar_lea.hbm %s2, %s174
          %s177 = sshll.u32 %s170, 4
          %s178 = int_to_ptr.vmem [resolvable:$true] %s177
          %180 = dma.hbm_to_vmem [thread:$0]  %s175, 64, %s178, %s167
        $region28: #{tpu_custom_call.1} parent=19 // pred_fallthru
          _
      $region20: #{tpu_custom_call.1} parent=5 // pred_fallthru
        _
      %p181 = scmp.le.s32.totalorder 1, %s16
      %p182 = scmp.lt.s32.totalorder %s16, 3
      %p183 = pnand %p181, %p182
      %p184 = pneg %p183
      // Predicated region
      $region29: #{tpu_custom_call.1} parent=5 // pred_check
        _
      $region30: #{tpu_custom_call.1} parent=5 // pred_check_branch
        %186 = sbr.rel (%p183) target = $region32
      $region31: #{tpu_custom_call.1} parent=5 // pred_region
        %s187 = ssub.s32 %s16, 1
        %s188 = sand.u32 %s21, 1
        %s189 = scalar_lea.sflag [#allocation3], %s188
        %s190 = sand.u32 %s29, 1
        %s191 = smul.addr %s190, 4
        %s192 = scalar_lea.vmem [#allocation2], %s191
        // Predicated region
        $region33: #{tpu_custom_call.1} parent=31 // pred_check
          %p193 = pneg %p42
        $region34: #{tpu_custom_call.1} parent=31 // pred_check_branch
          %195 = sbr.rel (%p193) target = $region36
        $region35: #{tpu_custom_call.1} parent=31 // pred_region
          %196 = dma.done %s189, 64
        $region36: #{tpu_custom_call.1} parent=31 // pred_fallthru
          _
        // Predicated region
        $region37: #{tpu_custom_call.1} parent=31 // pred_check
          %p197 = pneg %p63
        $region38: #{tpu_custom_call.1} parent=31 // pred_check_branch
          %199 = sbr.rel (%p197) target = $region40
        $region39: #{tpu_custom_call.1} parent=31 // pred_region
          %200 = dma.done [#allocation6], 64
        $region40: #{tpu_custom_call.1} parent=31 // pred_fallthru
          _
        %s201 = sand.u32 %s21, 1
        %s202 = scalar_lea.sflag [#allocation3], %s201
        %s203 = sand.u32 %s76, 1
        %s204 = smul.addr %s203, 4
        %s205 = scalar_lea.vmem [#allocation7], %s204
        // Predicated region
        $region41: #{tpu_custom_call.1} parent=31 // pred_check
          %p206 = pneg %p89
        $region42: #{tpu_custom_call.1} parent=31 // pred_check_branch
          %208 = sbr.rel (%p206) target = $region44
        $region43: #{tpu_custom_call.1} parent=31 // pred_region
          %209 = dma.done %s202, 64
        $region44: #{tpu_custom_call.1} parent=31 // pred_fallthru
          _
        %s210 = sand.u32 %s21, 1
        %s211 = scalar_lea.sflag [#allocation3], %s210
        %s212 = sand.u32 %s29, 1
        %s213 = smul.addr %s212, 4
        %s214 = scalar_lea.vmem [#allocation2], %s213
        %p215 = pneg %p42
        %p216 = pneg %p39
        %p217 = pneg %p63
        %p218 = pneg %p60
        %s219 = sand.u32 %s21, 1
        %s220 = scalar_lea.sflag [#allocation3], %s219
        %s221 = sand.u32 %s76, 1
        %s222 = smul.addr %s221, 4
        %s223 = scalar_lea.vmem [#allocation7], %s222
        %p224 = pneg %p89
        %p225 = pneg %p86
        %p226 = pneg %p115
        %p227 = pneg %p112
        %s228 = sand.u32 %s102, 1
        %s229 = scalar_lea.sflag [#allocation4], %s228
        %s230 = sand.u32 %s102, 1
        %s231 = smul.addr %s230, 4
        %s232 = scalar_lea.vmem [#allocation8], %s231
        %v233 = vld [vmem:[%s192] sm:$0xf]
        %v234 = vld [vmem:[%s205] sm:$0xf]
        %v235 = vld [vmem:[#allocation5] sm:$0xf]
        %vm236 = vcmask 31744
        %v238 = vsel %vm236, %v233, 0
        %vm240 = vcmask 1043456
        %v242 = vsel %vm240, %v235, 0
        %244 = vmatprep.subr.mxu0 0.0
        %245 = vmatpush1.msra.mxu0 %v242
        %246 = vmatprep.subr.mxu0 0.0
        %247 = vmatpush1.msra.mxu0 0.0
        %248 = vmatprep.subr.mxu0 0.0
        %249 = vmatpush1.msra.mxu0 0.0
        %250 = vmatprep.subr.mxu0 0.0
        %251 = vmatpush1.msra.mxu0 0.0
        %252 = vmatprep.subr.mxu0 0.0
        %253 = vmatpush1.msra.mxu0 0.0
        %254 = vmatprep.subr.mxu0 0.0
        %255 = vmatpush1.msra.mxu0 0.0
        %256 = vmatprep.subr.mxu0 0.0
        %257 = vmatpush1.msra.mxu0 0.0
        %258 = vmatprep.subr.mxu0 0.0
        %259 = vmatpush1.msra.mxu0 0.0
        %260 = vmatprep.subr.mxu0 0.0
        %261 = vmatpush1.msra.mxu0 0.0
        %262 = vmatprep.subr.mxu0 0.0
        %263 = vmatpush1.msra.mxu0 0.0
        %264 = vmatprep.subr.mxu0 0.0
        %265 = vmatpush1.msra.mxu0 0.0
        %266 = vmatprep.subr.mxu0 0.0
        %267 = vmatpush1.msra.mxu0 0.0
        %268 = vmatprep.subr.mxu0 0.0
        %269 = vmatpush1.msra.mxu0 0.0
        %270 = vmatprep.subr.mxu0 0.0
        %271 = vmatpush1.msra.mxu0 0.0
        %272 = vmatprep.subr.mxu0 0.0
        %273 = vmatpush1.msra.mxu0 0.0
        %274 = vmatprep.subr.mxu0 0.0
        %275 = vmatpush1.msra.mxu0 0.0
        %276 = vmatprep.subr.mxu0 0.0
        %277 = vmatpush1.msra.mxu0 0.0
        %278 = vmatprep.subr.mxu0 0.0
        %279 = vmatpush1.msra.mxu0 0.0
        %280 = vmatprep.subr.mxu0 0.0
        %281 = vmatpush1.msra.mxu0 0.0
        %282 = vmatprep.subr.mxu0 0.0
        %283 = vmatpush1.msra.mxu0 0.0
        %284 = vmatprep.subr.mxu0 0.0
        %285 = vmatpush1.msra.mxu0 0.0
        %286 = vmatprep.subr.mxu0 0.0
        %287 = vmatpush1.msra.mxu0 0.0
        %288 = vmatprep.subr.mxu0 0.0
        %289 = vmatpush1.msra.mxu0 0.0
        %290 = vmatprep.subr.mxu0 0.0
        %291 = vmatpush1.msra.mxu0 0.0
        %292 = vmatprep.subr.mxu0 0.0
        %293 = vmatpush1.msra.mxu0 0.0
        %294 = vmatprep.subr.mxu0 0.0
        %295 = vmatpush1.msra.mxu0 0.0
        %296 = vmatprep.subr.mxu0 0.0
        %297 = vmatpush1.msra.mxu0 0.0
        %298 = vmatprep.subr.mxu0 0.0
        %299 = vmatpush1.msra.mxu0 0.0
        %300 = vmatprep.subr.mxu0 0.0
        %301 = vmatpush1.msra.mxu0 0.0
        %302 = vmatprep.subr.mxu0 0.0
        %303 = vmatpush1.msra.mxu0 0.0
        %304 = vmatprep.subr.mxu0 0.0
        %305 = vmatpush1.msra.mxu0 0.0
        %306 = vmatprep.subr.mxu0 0.0
        %307 = vmatpush1.msra.mxu0 0.0
        %308 = vmatprep.mubr.f32.mxu0 0.0
        %309 = vmatmul.mubr.f32.gmra.mrb[0].mxu0 %v238
        %v310 = vpop.f32.mrb[0].mxu0
        %v311 = vadd.f32 0.0, %v310
        %v312 = vpop.f32.mrb[0].mxu0
        %313 = vdwg.mxu0
        %315 = vrot.lane.b32.xlu0 %v311, 124
        %v316 = vpop.permute.xlu0 %315
        %v317 = vsel %vm236, %v311, 0
        %v319 = vsel %vm236, %v316, 0
        %321 = vmatprep.subr.mxu0 0.0
        %322 = vmatpush1.xpose.msra.mxu0 %v319
        %323 = vmatprep.subr.mxu0 0.0
        %324 = vmatpush1.xpose.msra.mxu0 0.0
        %325 = vmatprep.subr.mxu0 0.0
        %326 = vmatpush1.xpose.msra.mxu0 0.0
        %327 = vmatprep.subr.mxu0 0.0
        %328 = vmatpush1.xpose.msra.mxu0 0.0
        %329 = vmatprep.subr.mxu0 0.0
        %330 = vmatpush1.xpose.msra.mxu0 0.0
        %331 = vmatprep.subr.mxu0 0.0
        %332 = vmatpush1.xpose.msra.mxu0 0.0
        %333 = vmatprep.subr.mxu0 0.0
        %334 = vmatpush1.xpose.msra.mxu0 0.0
        %335 = vmatprep.subr.mxu0 0.0
        %336 = vmatpush1.xpose.msra.mxu0 0.0
        %337 = vmatprep.subr.mxu0 0.0
        %338 = vmatpush1.xpose.msra.mxu0 0.0
        %339 = vmatprep.subr.mxu0 0.0
        %340 = vmatpush1.xpose.msra.mxu0 0.0
        %341 = vmatprep.subr.mxu0 0.0
        %342 = vmatpush1.xpose.msra.mxu0 0.0
        %343 = vmatprep.subr.mxu0 0.0
        %344 = vmatpush1.xpose.msra.mxu0 0.0
        %345 = vmatprep.subr.mxu0 0.0
        %346 = vmatpush1.xpose.msra.mxu0 0.0
        %347 = vmatprep.subr.mxu0 0.0
        %348 = vmatpush1.xpose.msra.mxu0 0.0
        %349 = vmatprep.subr.mxu0 0.0
        %350 = vmatpush1.xpose.msra.mxu0 0.0
        %351 = vmatprep.subr.mxu0 0.0
        %352 = vmatpush1.xpose.msra.mxu0 0.0
        %353 = vmatprep.subr.mxu0 0.0
        %354 = vmatpush1.xpose.msra.mxu0 0.0
        %355 = vmatprep.subr.mxu0 0.0
        %356 = vmatpush1.xpose.msra.mxu0 0.0
        %357 = vmatprep.subr.mxu0 0.0
        %358 = vmatpush1.xpose.msra.mxu0 0.0
        %359 = vmatprep.subr.mxu0 0.0
        %360 = vmatpush1.xpose.msra.mxu0 0.0
        %361 = vmatprep.subr.mxu0 0.0
        %362 = vmatpush1.xpose.msra.mxu0 0.0
        %363 = vmatprep.subr.mxu0 0.0
        %364 = vmatpush1.xpose.msra.mxu0 0.0
        %365 = vmatprep.subr.mxu0 0.0
        %366 = vmatpush1.xpose.msra.mxu0 0.0
        %367 = vmatprep.subr.mxu0 0.0
        %368 = vmatpush1.xpose.msra.mxu0 0.0
        %369 = vmatprep.subr.mxu0 0.0
        %370 = vmatpush1.xpose.msra.mxu0 0.0
        %371 = vmatprep.subr.mxu0 0.0
        %372 = vmatpush1.xpose.msra.mxu0 0.0
        %373 = vmatprep.subr.mxu0 0.0
        %374 = vmatpush1.xpose.msra.mxu0 0.0
        %375 = vmatprep.subr.mxu0 0.0
        %376 = vmatpush1.xpose.msra.mxu0 0.0
        %377 = vmatprep.subr.mxu0 0.0
        %378 = vmatpush1.xpose.msra.mxu0 0.0
        %379 = vmatprep.subr.mxu0 0.0
        %380 = vmatpush1.xpose.msra.mxu0 0.0
        %381 = vmatprep.subr.mxu0 0.0
        %382 = vmatpush1.xpose.msra.mxu0 0.0
        %383 = vmatprep.subr.mxu0 0.0
        %384 = vmatpush1.xpose.msra.mxu0 0.0
        %385 = vmatprep.mubr.f32.mxu0 0.0
        %386 = vmatmul.mubr.f32.gmra.mrb[0].mxu0 %v317
        %v387 = vpop.f32.mrb[0].mxu0
        %v388 = vadd.f32 0.0, %v387
        %v389 = vpop.f32.mrb[0].mxu0
        %390 = vdwg.mxu0
        %v391 = vmul.f32 %v388, 2.0
        %vm392 = vcmask 27648
        %v393 = vsel %vm392, %v391, -inf
        %394 = vmax.xlane.f32.xlu0 %v393
        %v395 = vpop.xlane.xlu0 %394
        %v396 = vsub.f32 %v391, %v395
        %v397 = vmul.f32 %v396, 1.442695
        %v398 = vpow.pop %v397
        %v399 = vsel %vm392, %v398, 0.0
        %400 = vadd.xlane.f32.xlu0 %v399
        %v401 = vpop.xlane.xlu0 %400
        %v402 = vrcp.pop %v401
        %v403 = vmul.f32 %v398, %v402
        %vm404 = vcmp.ge.u32.totalorder %v234, 858993459
        %v405 = vmul.f32 %v403, 1.25
        %v406 = vsel %vm404, %v405, 0.0
        %407 = vrot.lane.b32.xlu0 %v311, 120
        %v408 = vpop.permute.xlu0 %407
        %v410 = vsel %vm236, %v406, 0
        %v412 = vsel %vm240, %v408, 0
        %414 = vmatprep.subr.mxu0 0.0
        %415 = vmatpush1.msra.mxu0 %v412
        %416 = vmatprep.subr.mxu0 0.0
        %417 = vmatpush1.msra.mxu0 0.0
        %418 = vmatprep.subr.mxu0 0.0
        %419 = vmatpush1.msra.mxu0 0.0
        %420 = vmatprep.subr.mxu0 0.0
        %421 = vmatpush1.msra.mxu0 0.0
        %422 = vmatprep.subr.mxu0 0.0
        %423 = vmatpush1.msra.mxu0 0.0
        %424 = vmatprep.subr.mxu0 0.0
        %425 = vmatpush1.msra.mxu0 0.0
        %426 = vmatprep.subr.mxu0 0.0
        %427 = vmatpush1.msra.mxu0 0.0
        %428 = vmatprep.subr.mxu0 0.0
        %429 = vmatpush1.msra.mxu0 0.0
        %430 = vmatprep.subr.mxu0 0.0
        %431 = vmatpush1.msra.mxu0 0.0
        %432 = vmatprep.subr.mxu0 0.0
        %433 = vmatpush1.msra.mxu0 0.0
        %434 = vmatprep.subr.mxu0 0.0
        %435 = vmatpush1.msra.mxu0 0.0
        %436 = vmatprep.subr.mxu0 0.0
        %437 = vmatpush1.msra.mxu0 0.0
        %438 = vmatprep.subr.mxu0 0.0
        %439 = vmatpush1.msra.mxu0 0.0
        %440 = vmatprep.subr.mxu0 0.0
        %441 = vmatpush1.msra.mxu0 0.0
        %442 = vmatprep.subr.mxu0 0.0
        %443 = vmatpush1.msra.mxu0 0.0
        %444 = vmatprep.subr.mxu0 0.0
        %445 = vmatpush1.msra.mxu0 0.0
        %446 = vmatprep.subr.mxu0 0.0
        %447 = vmatpush1.msra.mxu0 0.0
        %448 = vmatprep.subr.mxu0 0.0
        %449 = vmatpush1.msra.mxu0 0.0
        %450 = vmatprep.subr.mxu0 0.0
        %451 = vmatpush1.msra.mxu0 0.0
        %452 = vmatprep.subr.mxu0 0.0
        %453 = vmatpush1.msra.mxu0 0.0
        %454 = vmatprep.subr.mxu0 0.0
        %455 = vmatpush1.msra.mxu0 0.0
        %456 = vmatprep.subr.mxu0 0.0
        %457 = vmatpush1.msra.mxu0 0.0
        %458 = vmatprep.subr.mxu0 0.0
        %459 = vmatpush1.msra.mxu0 0.0
        %460 = vmatprep.subr.mxu0 0.0
        %461 = vmatpush1.msra.mxu0 0.0
        %462 = vmatprep.subr.mxu0 0.0
        %463 = vmatpush1.msra.mxu0 0.0
        %464 = vmatprep.subr.mxu0 0.0
        %465 = vmatpush1.msra.mxu0 0.0
        %466 = vmatprep.subr.mxu0 0.0
        %467 = vmatpush1.msra.mxu0 0.0
        %468 = vmatprep.subr.mxu0 0.0
        %469 = vmatpush1.msra.mxu0 0.0
        %470 = vmatprep.subr.mxu0 0.0
        %471 = vmatpush1.msra.mxu0 0.0
        %472 = vmatprep.subr.mxu0 0.0
        %473 = vmatpush1.msra.mxu0 0.0
        %474 = vmatprep.subr.mxu0 0.0
        %475 = vmatpush1.msra.mxu0 0.0
        %476 = vmatprep.subr.mxu0 0.0
        %477 = vmatpush1.msra.mxu0 0.0
        %478 = vmatprep.mubr.f32.mxu0 0.0
        %479 = vmatmul.mubr.f32.gmra.mrb[0].mxu0 %v410
        %v480 = vpop.f32.mrb[0].mxu0
        %v481 = vadd.f32 0.0, %v480
        %v482 = vpop.f32.mrb[0].mxu0
        %483 = vdwg.mxu0
        %484 = vst.msk [vmem:[%s232] sm:$0xf] %vm392, %v481
        %s485 = sand.u32 %s102, 1
        %s486 = scalar_lea.sflag [#allocation4], %s485
        %s487 = sand.u32 %s102, 1
        %s488 = smul.addr %s487, 4
        %s489 = scalar_lea.vmem [#allocation8], %s488
        // Predicated region
        $region45: #{tpu_custom_call.1} parent=31 // pred_check
          %p490 = pneg %p112
        $region46: #{tpu_custom_call.1} parent=31 // pred_check_branch
          %492 = sbr.rel (%p490) target = $region48
        $region47: #{tpu_custom_call.1} parent=31 // pred_region
          %s494 = ssub.s32 64, 64
          %495 = vsyncadd %s486, %s494
          %s496 = smul.addr %s21, 64
          %s497 = scalar_lea.hbm %s3, %s496
          %s499 = sshll.u32 %s489, 4
          %s500 = int_to_ptr.vmem [resolvable:$true] %s499
          %502 = dma.vmem_to_hbm [thread:$0]  %s500, 64, %s497, %s486
        $region48: #{tpu_custom_call.1} parent=31 // pred_fallthru
          _
      $region32: #{tpu_custom_call.1} parent=5 // pred_fallthru
        _
      %p503 = scmp.le.s32.totalorder 2, %s16
      // Predicated region
      $region49: #{tpu_custom_call.1} parent=5 // pred_check
        %p504 = pneg %p503
      $region50: #{tpu_custom_call.1} parent=5 // pred_check_branch
        %506 = sbr.rel (%p504) target = $region52
      $region51: #{tpu_custom_call.1} parent=5 // pred_region
        %s507 = ssub.s32 %s16, 2
        // Predicated region
        $region53: #{tpu_custom_call.1} parent=51 // pred_check
          %p508 = pneg %p118
        $region54: #{tpu_custom_call.1} parent=51 // pred_check_branch
          %510 = sbr.rel (%p508) target = $region56
        $region55: #{tpu_custom_call.1} parent=51 // pred_region
          %s511 = sand.u32 %s103, 1
          %s512 = scalar_lea.sflag [#allocation4], %s511
          %s513 = sand.u32 %s103, 1
          %s514 = smul.addr %s513, 4
          %s515 = scalar_lea.vmem [#allocation8], %s514
          %516 = dma.done %s512, 64
        $region56: #{tpu_custom_call.1} parent=51 // pred_fallthru
          _
      $region52: #{tpu_custom_call.1} parent=5 // pred_fallthru
        _
    $region6: #{tpu_custom_call.1} parent=1 // loop_footer
      %s20 = sadd.s32 1, %s16
    $region7: #{tpu_custom_call.1} parent=1 // loop_footer_branch
      %15 = sbr.rel target = $region3
    $region8: #{tpu_custom_call.1} parent=1 // loop_exit
      _
    %517 = vsyncpa [#allocation3], 1
    %s518 = scalar_lea.sflag [#allocation3], 1
    %519 = vsyncpa %s518, 1
    %520 = vsyncpa [#allocation6], 1
    %521 = vsyncpa [#allocation4], 1
    %s522 = scalar_lea.sflag [#allocation4], 1
    %523 = vsyncpa %s522, 1

</llo_original>
